<compile_context>
chip_gen: v5e
topology: v5e:2x2
jax: 0.10.0
libtpu: 0.0.40
codegen_flags: <defaults>
</compile_context>

<pallas_src>
import jax
import jax.numpy as jnp
from jax.experimental import pallas as pl
from jax.experimental.pallas import tpu as pltpu

EPS = 1e-5

# Safe across generations: == v7x scoped default, raises v5e's 16 MiB default,
# well under v5e/v6e 128 MiB physical.
_VMEM_LIMIT_BYTES = 32 * 1024 * 1024
# Target bytes of x per grid-step block (4 pipeline buffers + f32 temporaries
# stay comfortably inside the scoped VMEM limit).
_TARGET_TILE_BYTES = 2 * 1024 * 1024


def _round_up(n, m):
    return ((n + m - 1) // m) * m


def _ln_stats(x):
    """Fused mean / inverse-stddev over the last axis of an f32 (tm, D) tile."""
    inv_d = jnp.float32(1.0 / x.shape[-1])
    s1 = jnp.sum(x, axis=-1, keepdims=True)
    s2 = jnp.sum(x * x, axis=-1, keepdims=True)
    mean = s1 * inv_d
    # E[x^2] - mean^2 can go slightly negative for near-constant rows; clamp.
    var = jnp.maximum(s2 * inv_d - mean * mean, 0.0)
    return mean, jax.lax.rsqrt(var + jnp.float32(EPS))


def _layernorm_kernel_bias(x_ref, w_ref, b_ref, o_ref):
    # x_ref: (tm, D); w_ref/b_ref: (1, D) already f32.
    x = x_ref[...].astype(jnp.float32)
    mean, inv = _ln_stats(x)
    y = (x - mean) * inv * w_ref[...] + b_ref[...]
    o_ref[...] = y.astype(o_ref.dtype)


def _layernorm_kernel_nobias(x_ref, w_ref, o_ref):
    x = x_ref[...].astype(jnp.float32)
    mean, inv = _ln_stats(x)
    y = (x - mean) * inv * w_ref[...]
    o_ref[...] = y.astype(o_ref.dtype)


def _pick_row_tile(rows, D, itemsize):
    # Sublane packing: 8 rows/vreg for 4-byte, 16 for 2-byte, 32 for 1-byte.
    sublane = {4: 8, 2: 16, 1: 32}.get(itemsize, 8)
    tm = _TARGET_TILE_BYTES // (D * itemsize)
    tm = max(sublane, (tm // sublane) * sublane)
    # Keep >= 2 grid steps when rows allow it so both v7x TensorCores get work.
    half = _round_up(pl.cdiv(rows, 2), sublane)
    tm = min(tm, max(sublane, half))
    return tm


@jax.jit
def layer_norm(x, weight, bias=None):
    """LayerNorm over the last axis of x. weight: (D,), bias: (D,) or None."""
    orig_shape = x.shape
    D = orig_shape[-1]
    rows = 1
    for s in orig_shape[:-1]:
        rows *= s
    x2 = x.reshape(rows, D)

    itemsize = jnp.dtype(x.dtype).itemsize
    tm = _pick_row_tile(rows, D, itemsize)

    # Zero-pad rows to a multiple of tm; padded rows produce finite garbage
    # (normalize-to-bias) and are sliced off below.
    rows_p = _round_up(rows, tm)
    if rows_p != rows:
        x2 = jnp.pad(x2, ((0, rows_p - rows), (0, 0)))
    grid = (rows_p // tm,)

    # Pre-cast params to f32 once (no per-tile VPU cast inside the kernel).
    w2 = weight.astype(jnp.float32).reshape(1, D)

    # TODO(synk): for production D < 128 a lane-dense repack (g rows per
    # 128-lane vreg) would avoid masked vst.msk stores; not needed for D >= 128.
    x_spec = pl.BlockSpec((tm, D), lambda i: (i, 0))
    p_spec = pl.BlockSpec((1, D), lambda i: (0, 0))
    out_spec = pl.BlockSpec((tm, D), lambda i: (i, 0))
    out_shape = jax.ShapeDtypeStruct((rows_p, D), x.dtype)

    compiler_params = pltpu.CompilerParams(
        dimension_semantics=("parallel",),
        vmem_limit_bytes=_VMEM_LIMIT_BYTES,
    )

    if bias is not None:
        b2 = bias.astype(jnp.float32).reshape(1, D)
        out = pl.pallas_call(
            _layernorm_kernel_bias,
            out_shape=out_shape,
            grid=grid,
            in_specs=[x_spec, p_spec, p_spec],
            out_specs=out_spec,
            compiler_params=compiler_params,
        )(x2, w2, b2)
    else:
        out = pl.pallas_call(
            _layernorm_kernel_nobias,
            out_shape=out_shape,
            grid=grid,
            in_specs=[x_spec, p_spec],
            out_specs=out_spec,
            compiler_params=compiler_params,
        )(x2, w2)

    if rows_p != rows:
        out = out[:rows]
    return out.reshape(orig_shape)


def _reference_layer_norm(x, weight, bias=None):
    xf = x.astype(jnp.float32)
    mean = jnp.mean(xf, axis=-1, keepdims=True)
    var = jnp.mean((xf - mean) ** 2, axis=-1, keepdims=True)
    y = (xf - mean) * jax.lax.rsqrt(var + EPS) * weight
    if bias is not None:
        y = y + bias
    return y.astype(x.dtype)


if __name__ == "__main__":
    key = jax.random.PRNGKey(0)
    batch, seq, hidden = 2, 8, 32

    x = jax.random.normal(key, (batch, seq, hidden), dtype=jnp.float32)

    # Deterministic parameter init per the module's __init__:
    #   weight = ones(ndim), bias = zeros(ndim) (bias=True case).
    weight = jnp.ones((hidden,), dtype=jnp.float32)
    bias = jnp.zeros((hidden,), dtype=jnp.float32)

    # bias=True path
    out = jax.block_until_ready(layer_norm(x, weight, bias))
    ref = _reference_layer_norm(x, weight, bias)
    assert jnp.allclose(out, ref, atol=1e-4, rtol=1e-4), "bias=True mismatch"

    # bias=False path (module with bias=False -> self.bias is None)
    out_nb = jax.block_until_ready(layer_norm(x, weight, None))
    ref_nb = _reference_layer_norm(x, weight, None)
    assert jnp.allclose(out_nb, ref_nb, atol=1e-4, rtol=1e-4), "bias=False mismatch"

    # Non-divisible row count (exercises cdiv grid + zero-pad tail path).
    key2 = jax.random.PRNGKey(1)
    x_odd = jax.random.normal(key2, (3, 7, hidden), dtype=jnp.float32)
    out_odd = jax.block_until_ready(layer_norm(x_odd, weight, bias))
    ref_odd = _reference_layer_norm(x_odd, weight, bias)
    assert jnp.allclose(out_odd, ref_odd, atol=1e-4, rtol=1e-4), "ragged mismatch"

    print("KERNEL_OK")
</pallas_src>

<mosaic_0001>
module attributes {stable_mosaic.version = 11 : i64} {
  func.func @_layernorm_kernel_bias(%arg0: i32, %arg1: memref<8x32xf32, #tpu.memory_space<vmem>>, %arg2: memref<1x32xf32, #tpu.memory_space<vmem>>, %arg3: memref<1x32xf32, #tpu.memory_space<vmem>>, %arg4: memref<8x32xf32, #tpu.memory_space<vmem>>) attributes {dimension_semantics = [#tpu.dimension_semantics<parallel>], iteration_bounds = array<i64: 2>, scalar_prefetch = 0 : i64, scratch_operands = 0 : i64, tpu.core_type = #tpu.core_type<tc>, window_params = [{transform_indices = @transform_0, window_bounds = array<i64: 8, 32>}, {pipeline_mode = #tpu.pipeline_mode<synchronous>, transform_indices = @transform_1, window_bounds = array<i64: 1, 32>}, {pipeline_mode = #tpu.pipeline_mode<synchronous>, transform_indices = @transform_2, window_bounds = array<i64: 1, 32>}, {transform_indices = @transform_3, window_bounds = array<i64: 8, 32>}]} {
    %c0 = arith.constant 0 : index
    %c0_0 = arith.constant 0 : index
    %0 = vector.load %arg1[%c0, %c0_0] : memref<8x32xf32, #tpu.memory_space<vmem>>, vector<8x32xf32>
    %cst = arith.constant dense<0.000000e+00> : vector<8xf32>
    %1 = vector.multi_reduction <add>, %0, %cst [1] : vector<8x32xf32> to vector<8xf32>
    %2 = vector.shape_cast %1 : vector<8xf32> to vector<8x1xf32>
    %3 = arith.mulf %0, %0 : vector<8x32xf32>
    %cst_1 = arith.constant dense<0.000000e+00> : vector<8xf32>
    %4 = vector.multi_reduction <add>, %3, %cst_1 [1] : vector<8x32xf32> to vector<8xf32>
    %5 = vector.shape_cast %4 : vector<8xf32> to vector<8x1xf32>
    %cst_2 = arith.constant 3.125000e-02 : f32
    %6 = vector.broadcast %cst_2 : f32 to vector<8x1xf32>
    %7 = arith.mulf %2, %6 : vector<8x1xf32>
    %cst_3 = arith.constant 3.125000e-02 : f32
    %8 = vector.broadcast %cst_3 : f32 to vector<8x1xf32>
    %9 = arith.mulf %5, %8 : vector<8x1xf32>
    %10 = arith.mulf %7, %7 : vector<8x1xf32>
    %11 = arith.subf %9, %10 : vector<8x1xf32>
    %cst_4 = arith.constant 0.000000e+00 : f32
    %12 = vector.broadcast %cst_4 : f32 to vector<8x1xf32>
    %13 = arith.maximumf %11, %12 : vector<8x1xf32>
    %cst_5 = arith.constant 9.99999974E-6 : f32
    %14 = vector.broadcast %cst_5 : f32 to vector<8x1xf32>
    %15 = arith.addf %13, %14 : vector<8x1xf32>
    %16 = math.rsqrt %15 : vector<8x1xf32>
    %17 = vector.broadcast %7 : vector<8x1xf32> to vector<8x32xf32>
    %18 = arith.subf %0, %17 : vector<8x32xf32>
    %19 = vector.broadcast %16 : vector<8x1xf32> to vector<8x32xf32>
    %20 = arith.mulf %18, %19 : vector<8x32xf32>
    %c0_6 = arith.constant 0 : index
    %c0_7 = arith.constant 0 : index
    %21 = vector.load %arg2[%c0_6, %c0_7] : memref<1x32xf32, #tpu.memory_space<vmem>>, vector<1x32xf32>
    %22 = vector.broadcast %21 : vector<1x32xf32> to vector<8x32xf32>
    %23 = arith.mulf %20, %22 : vector<8x32xf32>
    %c0_8 = arith.constant 0 : index
    %c0_9 = arith.constant 0 : index
    %24 = vector.load %arg3[%c0_8, %c0_9] : memref<1x32xf32, #tpu.memory_space<vmem>>, vector<1x32xf32>
    %25 = vector.broadcast %24 : vector<1x32xf32> to vector<8x32xf32>
    %26 = arith.addf %23, %25 : vector<8x32xf32>
    %c0_10 = arith.constant 0 : index
    %c0_11 = arith.constant 0 : index
    %27 = vector.load %arg4[%c0_10, %c0_11] : memref<8x32xf32, #tpu.memory_space<vmem>>, vector<8x32xf32>
    tpu.vector_store %arg4[%c0_10, %c0_11], %26 {strides = array<i32>} : memref<8x32xf32, #tpu.memory_space<vmem>>, vector<8x32xf32>,
    return
  }
  func.func @transform_0(%arg0: i32) -> (i32, i32) {
    %c0_i32 = arith.constant 0 : i32
    %c0_i32_0 = arith.constant 0 : i32
    return %arg0, %c0_i32 : i32, i32
  }
  func.func @transform_1(%arg0: i32) -> (i32, i32) {
    %c0_i32 = arith.constant 0 : i32
    %c0_i32_0 = arith.constant 0 : i32
    %c0_i32_1 = arith.constant 0 : i32
    return %c0_i32, %c0_i32_0 : i32, i32
  }
  func.func @transform_2(%arg0: i32) -> (i32, i32) {
    %c0_i32 = arith.constant 0 : i32
    %c0_i32_0 = arith.constant 0 : i32
    %c0_i32_1 = arith.constant 0 : i32
    return %c0_i32, %c0_i32_0 : i32, i32
  }
  func.func @transform_3(%arg0: i32) -> (i32, i32) {
    %c0_i32 = arith.constant 0 : i32
    %c0_i32_0 = arith.constant 0 : i32
    return %arg0, %c0_i32 : i32, i32
  }
}

</mosaic_0001>

<llo_original>
// kernel: layer_norm.1
$region0: #{layer_norm.1}
  #allocation0 [shape = 'u32[]', space=smem, size = 0x4, offset = 0x4, fixed_abs, tag = 'smem constant byte address 0x4 - core index']
  #allocation1 [shape = 'u32[72,128]{1,0:T(1,128)}', space=vmem, size = 0x9000, scoped, tag = 'internal scratch']
  %s0 = inlined_call_operand.hbm [shape: f32[16,32], index: 0, kind: input, shape index: {}]
  %s1 = inlined_call_operand.vmem [shape: f32[1,32], index: 1, kind: input, shape index: {}]
  %s2 = inlined_call_operand.vmem [shape: f32[1,32], index: 2, kind: input, shape index: {}]
  %s3 = inlined_call_operand.hbm [shape: f32[16,32], index: 3, kind: output, shape index: {}]
  %s4 = sld [smem:[#allocation0]]
  $region49: #{layer_norm.1} parent=0
    _
  %s6 = ssub.s32 1, %s4
  %s7 = scalar_select 0, %s6, %s4
  $region1: #{layer_norm.1} parent=0
    #allocation2 [shape = 'u8[8192]{0}', space=vmem, size = 0x2000, scoped, tag = 'input window, operand 0']
    #allocation3 [shape = 's32[2]{0}', space=sflag, size = 0x8, scoped, tag = 'scoped memory for layer_norm.1']
    #allocation4 [shape = 's32[2]{0}', space=sflag, size = 0x8, scoped, tag = 'scoped memory for layer_norm.1']
    #allocation5 [shape = 'u8[8192]{0}', space=vmem, size = 0x2000, scoped, tag = 'output window, operand 0']
    %8 = vsyncpa [#allocation3], 0
    %s9 = scalar_lea.sflag [#allocation3], 1
    %10 = vsyncpa %s9, 0
    %11 = vsyncpa [#allocation4], 0
    %s12 = scalar_lea.sflag [#allocation4], 1
    %13 = vsyncpa %s12, 0
    loop: start=0, step=1, limit=4
    $region2: #{layer_norm.1} parent=1 // loop_pre_header
      _
    $region3: #{layer_norm.1} parent=1 // loop_header
      %s15 = sphi 0, %s19
      %p16 = scmp.ge.s32.totalorder %s15, 4
      %s25 = sphi 0, %s27
      %s28 = sphi 0, %s25
      %s29 = sphi 0, %s28
      %s45 = sphi 0, %s29
      %s49 = sphi 0, %s49
      %s51 = sphi 0, %s49
      %s52 = sphi 0, %s51
      %s66 = sphi 0, %s52
      %s70 = sphi 0, %s70
      %s72 = sphi 0, %s70
      %s73 = sphi 0, %s72
      %s87 = sphi 0, %s73
      %s93 = sphi 0, %s95
      %s96 = sphi 0, %s93
      %s97 = sphi 0, %s96
      %s113 = sphi 0, %s97
    $region4: #{layer_norm.1} parent=1 // loop_header_branch
      %18 = sbr.rel (%p16) target = $region8
    $region5: #{layer_norm.1} parent=1 // loop_body
      %s20 = ssub.s32 %s15, 1
      %s21 = ssub.s32 %s15, 2
      %s22 = sadd.s32 %s15, 1
      %s23 = ssub.s32 %s15, %s22
      %p24 = scmp.eq.s32.totalorder %s23, 0
      %s26 = sadd.s32 %s25, 1
      %s27 = scalar_select %p24, %s25, %s26
      %p30 = pneg %p24
      %p31 = scmp.eq.s32.totalorder %s15, 1
      %p32 = por %p30, %p31
      %p33 = scmp.ne.s32.totalorder %s25, %s28
      %p34 = scmp.eq.s32.totalorder %s15, 0
      %p35 = por %p33, %p34
      %p36 = scmp.ne.s32.totalorder %s25, %s28
      %p37 = scmp.eq.s32.totalorder %s20, 1
      %p38 = por %p36, %p37
      %p39 = scmp.ne.s32.totalorder %s28, %s29
      %p40 = scmp.eq.s32.totalorder %s20, 0
      %p41 = por %p39, %p40
      %p42 = scmp.ne.s32.totalorder %s28, %s29
      %p43 = scmp.eq.s32.totalorder %s21, 1
      %p44 = por %p42, %p43
      %p46 = scmp.ne.s32.totalorder %s29, %s45
      %p47 = scmp.eq.s32.totalorder %s21, 0
      %p48 = por %p46, %p47
      %s50 = sadd.s32 %s49, 1
      %p53 = scmp.eq.s32.totalorder %s15, 1
      %p54 = scmp.ne.s32.totalorder %s49, %s51
      %p55 = scmp.eq.s32.totalorder %s15, 0
      %p56 = por %p54, %p55
      %p57 = scmp.ne.s32.totalorder %s49, %s51
      %p58 = scmp.eq.s32.totalorder %s20, 1
      %p59 = por %p57, %p58
      %p60 = scmp.ne.s32.totalorder %s51, %s52
      %p61 = scmp.eq.s32.totalorder %s20, 0
      %p62 = por %p60, %p61
      %p63 = scmp.ne.s32.totalorder %s51, %s52
      %p64 = scmp.eq.s32.totalorder %s21, 1
      %p65 = por %p63, %p64
      %p67 = scmp.ne.s32.totalorder %s52, %s66
      %p68 = scmp.eq.s32.totalorder %s21, 0
      %p69 = por %p67, %p68
      %s71 = sadd.s32 %s70, 1
      %p74 = scmp.eq.s32.totalorder %s15, 1
      %p75 = scmp.ne.s32.totalorder %s70, %s72
      %p76 = scmp.eq.s32.totalorder %s15, 0
      %p77 = por %p75, %p76
      %p78 = scmp.ne.s32.totalorder %s70, %s72
      %p79 = scmp.eq.s32.totalorder %s20, 1
      %p80 = por %p78, %p79
      %p81 = scmp.ne.s32.totalorder %s72, %s73
      %p82 = scmp.eq.s32.totalorder %s20, 0
      %p83 = por %p81, %p82
      %p84 = scmp.ne.s32.totalorder %s72, %s73
      %p85 = scmp.eq.s32.totalorder %s21, 1
      %p86 = por %p84, %p85
      %p88 = scmp.ne.s32.totalorder %s73, %s87
      %p89 = scmp.eq.s32.totalorder %s21, 0
      %p90 = por %p88, %p89
      %s91 = ssub.s32 %s15, %s22
      %p92 = scmp.eq.s32.totalorder %s91, 0
      %s94 = sadd.s32 %s93, 1
      %s95 = scalar_select %p92, %s93, %s94
      %p98 = pneg %p92
      %p99 = scmp.eq.s32.totalorder %s15, 1
      %p100 = por %p98, %p99
      %p101 = scmp.ne.s32.totalorder %s93, %s96
      %p102 = scmp.eq.s32.totalorder %s15, 0
      %p103 = por %p101, %p102
      %p104 = scmp.ne.s32.totalorder %s93, %s96
      %p105 = scmp.eq.s32.totalorder %s20, 1
      %p106 = por %p104, %p105
      %p107 = scmp.ne.s32.totalorder %s96, %s97
      %p108 = scmp.eq.s32.totalorder %s20, 0
      %p109 = por %p107, %p108
      %p110 = scmp.ne.s32.totalorder %s96, %s97
      %p111 = scmp.eq.s32.totalorder %s21, 1
      %p112 = por %p110, %p111
      %p114 = scmp.ne.s32.totalorder %s97, %s113
      %p115 = scmp.eq.s32.totalorder %s21, 0
      %p116 = por %p114, %p115
      %p117 = scmp.le.s32.totalorder 1, %s15
      %p118 = scmp.lt.s32.totalorder %s15, 3
      %p119 = pnand %p117, %p118
      %p120 = pneg %p119
      // Predicated region
      $region9: #{layer_norm.1} parent=5 // pred_check
        _
      $region10: #{layer_norm.1} parent=5 // pred_check_branch
        %122 = sbr.rel (%p119) target = $region12
      $region11: #{layer_norm.1} parent=5 // pred_region
        %s123 = ssub.s32 %s15, 1
        // Predicated region
        $region13: #{layer_norm.1} parent=11 // pred_check
          %p124 = pneg %p62
        $region14: #{layer_norm.1} parent=11 // pred_check_branch
          %126 = sbr.rel (%p124) target = $region16
        $region15: #{layer_norm.1} parent=11 // pred_region
          _
        $region16: #{layer_norm.1} parent=11 // pred_fallthru
          _
        // Predicated region
        $region17: #{layer_norm.1} parent=11 // pred_check
          %p127 = pneg %p83
        $region18: #{layer_norm.1} parent=11 // pred_check_branch
          %129 = sbr.rel (%p127) target = $region20
        $region19: #{layer_norm.1} parent=11 // pred_region
          _
        $region20: #{layer_norm.1} parent=11 // pred_fallthru
          _
      $region12: #{layer_norm.1} parent=5 // pred_fallthru
        _
      %p130 = scmp.lt.s32.totalorder %s15, 2
      // Predicated region
      $region21: #{layer_norm.1} parent=5 // pred_check
        %p131 = pneg %p130
      $region22: #{layer_norm.1} parent=5 // pred_check_branch
        %133 = sbr.rel (%p131) target = $region24
      $region23: #{layer_norm.1} parent=5 // pred_region
        // Predicated region
        $region25: #{layer_norm.1} parent=23 // pred_check
          %p134 = pneg %p35
        $region26: #{layer_norm.1} parent=23 // pred_check_branch
          %136 = sbr.rel (%p134) target = $region28
        $region27: #{layer_norm.1} parent=23 // pred_region
          %s137 = sand.u32 %s25, 1
          %s138 = scalar_lea.sflag [#allocation3], %s137
          %s139 = sand.u32 %s25, 1
          %s140 = smul.addr %s139, 8
          %s141 = scalar_lea.vmem [#allocation2], %s140
          %143 = vsyncadd %s138, 0
          %s144 = smul.addr %s15, 8
          %s145 = scalar_lea.hbm %s0, %s144
          %s147 = sshll.u32 %s145, 4
          %s148 = int_to_ptr.hbm [resolvable:$true] %s147
          %s149 = sshll.u32 %s141, 4
          %s150 = int_to_ptr.vmem [resolvable:$true] %s149
          %152 = dma.hbm_to_vmem [thread:$0]  %s148, 128, %s150, %s138
        $region28: #{layer_norm.1} parent=23 // pred_fallthru
          _
      $region24: #{layer_norm.1} parent=5 // pred_fallthru
        _
      %p153 = scmp.le.s32.totalorder 1, %s15
      %p154 = scmp.lt.s32.totalorder %s15, 3
      %p155 = pnand %p153, %p154
      %p156 = pneg %p155
      // Predicated region
      $region29: #{layer_norm.1} parent=5 // pred_check
        _
      $region30: #{layer_norm.1} parent=5 // pred_check_branch
        %158 = sbr.rel (%p155) target = $region32
      $region31: #{layer_norm.1} parent=5 // pred_region
        %s159 = ssub.s32 %s15, 1
        %s160 = sand.u32 %s28, 1
        %s161 = scalar_lea.sflag [#allocation3], %s160
        %s162 = sand.u32 %s28, 1
        %s163 = smul.addr %s162, 8
        %s164 = scalar_lea.vmem [#allocation2], %s163
        // Predicated region
        $region33: #{layer_norm.1} parent=31 // pred_check
          %p165 = pneg %p41
        $region34: #{layer_norm.1} parent=31 // pred_check_branch
          %167 = sbr.rel (%p165) target = $region36
        $region35: #{layer_norm.1} parent=31 // pred_region
          %169 = dma.done %s161, 128
        $region36: #{layer_norm.1} parent=31 // pred_fallthru
          _
        %s170 = sand.u32 %s28, 1
        %s171 = scalar_lea.sflag [#allocation3], %s170
        %s172 = sand.u32 %s28, 1
        %s173 = smul.addr %s172, 8
        %s174 = scalar_lea.vmem [#allocation2], %s173
        %p175 = pneg %p41
        %p176 = pneg %p38
        %p177 = pneg %p62
        %p178 = pneg %p59
        %p179 = pneg %p83
        %p180 = pneg %p80
        %p181 = pneg %p109
        %p182 = pneg %p106
        %s183 = sand.u32 %s96, 1
        %s184 = scalar_lea.sflag [#allocation4], %s183
        %s185 = sand.u32 %s96, 1
        %s186 = smul.addr %s185, 8
        %s187 = scalar_lea.vmem [#allocation5], %s186
        %v188 = vld [vmem:[%s164] sm:$0xff]
        %vm189 = vcmask 261120
        %v190 = vsel %vm189, %v188, 0.0
        %191 = vadd.xlane.f32.xlu0 %v190
        %v192 = vpop.xlane.xlu0 %191
        %v193 = vmul.f32 %v188, %v188
        %v194 = vsel %vm189, %v193, 0.0
        %195 = vadd.xlane.f32.xlu0 %v194
        %v196 = vpop.xlane.xlu0 %195
        %v197 = vmul.f32 %v192, 0.03125
        %v198 = vmul.f32 %v196, 0.03125
        %v199 = vmul.f32 %v197, %v197
        %v200 = vsub.f32 %v198, %v199
        %v201 = vmax.f32 %v200, 0.0
        %v202 = vadd.f32 %v201, 1e-05
        %v203 = vrsqrt.pop %v202
        %v204 = vmul.f32 %v203, %v202
        %v205 = vmul.f32 %v204, %v203
        %v206 = vmul.f32 0.5, %v205
        %v207 = vsub.f32 1.5, %v206
        %v208 = vmul.f32 %v203, %v207
        %vm209 = vweird.f32 %v202
        %vm210 = vweird.f32 %v203
        %vm211 = vmor %vm209, %vm210
        %v212 = vsel %vm211, %v203, %v208
        %v213 = vsub.f32 %v188, %v197
        %v214 = vmul.f32 %v213, %v212
        %v215 = vld [vmem:[%s1] sm:$0x1]
        %v217 = vperm.slane %v215, 0
        %v219 = vmul.f32 %v214, %v217
        %v220 = vld [vmem:[%s2] sm:$0x1]
        %v222 = vperm.slane %v220, 0
        %v224 = vadd.f32 %v219, %v222
        %225 = vst.msk [vmem:[%s187] sm:$0xff] %vm189, %v224
        %s226 = sand.u32 %s96, 1
        %s227 = scalar_lea.sflag [#allocation4], %s226
        %s228 = sand.u32 %s96, 1
        %s229 = smul.addr %s228, 8
        %s230 = scalar_lea.vmem [#allocation5], %s229
        // Predicated region
        $region37: #{layer_norm.1} parent=31 // pred_check
          %p231 = pneg %p106
        $region38: #{layer_norm.1} parent=31 // pred_check_branch
          %233 = sbr.rel (%p231) target = $region40
        $region39: #{layer_norm.1} parent=31 // pred_region
          %235 = vsyncadd %s227, 0
          %s236 = smul.addr %s20, 8
          %s237 = scalar_lea.hbm %s3, %s236
          %s239 = sshll.u32 %s230, 4
          %s240 = int_to_ptr.vmem [resolvable:$true] %s239
          %s241 = sshll.u32 %s237, 4
          %s242 = int_to_ptr.hbm [resolvable:$true] %s241
          %244 = dma.vmem_to_hbm [thread:$0]  %s240, 128, %s242, %s227
        $region40: #{layer_norm.1} parent=31 // pred_fallthru
          _
      $region32: #{layer_norm.1} parent=5 // pred_fallthru
        _
      %p245 = scmp.le.s32.totalorder 2, %s15
      // Predicated region
      $region41: #{layer_norm.1} parent=5 // pred_check
        %p246 = pneg %p245
      $region42: #{layer_norm.1} parent=5 // pred_check_branch
        %248 = sbr.rel (%p246) target = $region44
      $region43: #{layer_norm.1} parent=5 // pred_region
        %s249 = ssub.s32 %s15, 2
        // Predicated region
        $region45: #{layer_norm.1} parent=43 // pred_check
          %p250 = pneg %p112
        $region46: #{layer_norm.1} parent=43 // pred_check_branch
          %252 = sbr.rel (%p250) target = $region48
        $region47: #{layer_norm.1} parent=43 // pred_region
          %s253 = sand.u32 %s97, 1
          %s254 = scalar_lea.sflag [#allocation4], %s253
          %s255 = sand.u32 %s97, 1
          %s256 = smul.addr %s255, 8
          %s257 = scalar_lea.vmem [#allocation5], %s256
          %259 = dma.done %s254, 128
        $region48: #{layer_norm.1} parent=43 // pred_fallthru
          _
      $region44: #{layer_norm.1} parent=5 // pred_fallthru
        _
    $region6: #{layer_norm.1} parent=1 // loop_footer
      %s19 = sadd.s32 1, %s15
    $region7: #{layer_norm.1} parent=1 // loop_footer_branch
      %14 = sbr.rel target = $region3
    $region8: #{layer_norm.1} parent=1 // loop_exit
      _
    %260 = vsyncpa [#allocation3], 1
    %s261 = scalar_lea.sflag [#allocation3], 1
    %262 = vsyncpa %s261, 1
    %263 = vsyncpa [#allocation4], 1
    %s264 = scalar_lea.sflag [#allocation4], 1
    %265 = vsyncpa %s264, 1

</llo_original>
